<compile_context>
chip_gen: v7x
topology: tpu7x:2x2x1
jax: 0.10.0
libtpu: 0.0.40
codegen_flags: <defaults>
</compile_context>

<pallas_src>
import math

import jax
import jax.numpy as jnp
from jax.experimental import pallas as pl
from jax.experimental.pallas import tpu as pltpu


def _abs_pos_enc_kernel(s_ref, c_ref, a_ref, b_ref, o_ref):
    # s_ref, c_ref : (tile_r, d_fold) resident base tables (fetched once,
    #                index_map is constant across the grid).
    # a_ref, b_ref : (1, 1, d_fold) per-tile angle-addition coefficients.
    # o_ref        : (tile_r, d_fold) output tile.
    # Pure VPU work (2 muls + 1 add per element); no EUP transcendentals.
    o_ref[...] = s_ref[...] * a_ref[0] + c_ref[...] * b_ref[0]


def absolute_positional_encoding(x, d_model: int, max_len: int,
                                 *, tile_budget_bytes: int = 2 * 1024 * 1024):
    """Equivalent of AbsolutePositionalEncoding(d_model, max_len)(x).

    x: [batch, seq_len] (values unused; only the static seq_len matters)
    returns: [seq_len, d_model] float32
    """
    _, seq_len = x.shape
    assert seq_len <= max_len, "seq_len must not exceed max_len"
    assert d_model % 2 == 0, "d_model must be even (same assumption as PyTorch)"

    # ---- lane-dense folding: pack k positions into the lane dim -------------
    # k_fold * d_model is a multiple of 128 so output stores are unmasked.
    k_fold = 128 // math.gcd(d_model, 128)
    if k_fold > 1 and d_model >= 128 and seq_len % k_fold != 0:
        # Folding a wide d_model that doesn't divide seq_len would force an
        # extra pad+slice copy of the whole table; the small masked tail of an
        # unfolded store is cheaper in that case.
        k_fold = 1
    d_fold = k_fold * d_model
    seq_pad = ((seq_len + k_fold - 1) // k_fold) * k_fold
    rows = seq_pad // k_fold                      # folded rows to produce

    # ---- byte-budgeted row tile (multiple of 8, clamped to [8, rows]) -------
    budget_rows = max(tile_budget_bytes // (4 * d_fold), 8)
    if budget_rows >= rows:
        tile_r = rows                             # full extent: always legal
    else:
        tile_r = max((budget_rows // 8) * 8, 8)
    num_tiles = (rows + tile_r - 1) // tile_r

    # ---- wrapper-side precompute (tiny, one-off XLA work) -------------------
    f32 = jnp.float32
    col = jnp.arange(d_fold)
    m = col % d_model                             # original feature column
    j = (col // d_model).astype(f32)              # position offset inside fold
    pair = (m // 2).astype(f32)                   # i in 10000**(2i/d_model)
    theta = jnp.exp(-(2.0 * pair / d_model) * jnp.log(f32(10000.0)))   # (d_fold,)
    odd = (m % 2) == 1

    # Base tables over one row tile: local position = kr*k_fold + j.
    kr = jnp.arange(tile_r, dtype=f32)[:, None]                        # (tile_r, 1)
    local = (kr * k_fold + j[None, :]) * theta[None, :]                # (tile_r, d_fold)
    sin_l, cos_l = jnp.sin(local), jnp.cos(local)
    s_base = jnp.where(odd[None, :], cos_l, sin_l)                     # sign/phase baked in
    c_base = jnp.where(odd[None, :], -sin_l, cos_l)

    # Per-tile coefficients: P_tile = t * tile_r * k_fold.
    p0 = (jnp.arange(num_tiles, dtype=f32) * f32(tile_r * k_fold))[:, None]
    phi = p0 * theta[None, :]                                          # (num_tiles, d_fold)
    coef_a = jnp.cos(phi)[:, None, :]                                  # (num_tiles, 1, d_fold)
    coef_b = jnp.sin(phi)[:, None, :]

    # ---- VMEM budget: 2x out + 2x S + 2x C buffers + small coefficients -----
    tile_bytes = tile_r * d_fold * 4
    vmem_limit = int(min(max(6 * tile_bytes + (2 << 20), 16 << 20), 32 << 20))

    cost = pl.CostEstimate(
        flops=3 * rows * d_fold,                  # 2 mul + 1 add per element
        transcendentals=0,                        # all sin/cos hoisted to wrapper
        bytes_accessed=4 * (rows * d_fold + 2 * tile_r * d_fold
                            + 2 * num_tiles * d_fold),
    )

    out_folded = pl.pallas_call(
        _abs_pos_enc_kernel,
        out_shape=jax.ShapeDtypeStruct((rows, d_fold), jnp.float32),
        grid=(num_tiles,),
        in_specs=[
            pl.BlockSpec((tile_r, d_fold), lambda t: (0, 0)),      # S (resident)
            pl.BlockSpec((tile_r, d_fold), lambda t: (0, 0)),      # C (resident)
            pl.BlockSpec((1, 1, d_fold), lambda t: (t, 0, 0)),     # A_t
            pl.BlockSpec((1, 1, d_fold), lambda t: (t, 0, 0)),     # B_t
        ],
        out_specs=pl.BlockSpec((tile_r, d_fold), lambda t: (t, 0)),
        compiler_params=pltpu.CompilerParams(
            dimension_semantics=("parallel",),
            vmem_limit_bytes=vmem_limit,
        ),
        cost_estimate=cost,
    )(s_base, c_base, coef_a, coef_b)

    # Row-major unfold back to (seq_pad, d_model) is a free reshape; slice off
    # any fold padding (only possible when d_model < 128, where the table is
    # small, so the slice copy is negligible).
    enc = out_folded.reshape(seq_pad, d_model)
    if seq_pad != seq_len:
        enc = enc[:seq_len]
    return enc


def _reference(seq_len, d_model):
    pos = jnp.arange(seq_len, dtype=jnp.float32)[:, None]
    two_i = jnp.arange(0, d_model, 2, dtype=jnp.float32)
    denom = jnp.power(jnp.float32(10000.0), two_i / d_model)
    enc = jnp.zeros((seq_len, d_model), jnp.float32)
    enc = enc.at[:, 0::2].set(jnp.sin(pos / denom))
    enc = enc.at[:, 1::2].set(jnp.cos(pos / denom))
    return enc


if __name__ == "__main__":
    key = jax.random.PRNGKey(0)
    k1, k2 = jax.random.split(key)

    # Primary check: small shapes implied by the module.
    batch, seq_len = 2, 8
    d_model, max_len = 32, 16
    x = jax.random.normal(k1, (batch, seq_len), dtype=jnp.float32)
    out = jax.block_until_ready(
        absolute_positional_encoding(x, d_model=d_model, max_len=max_len))
    ref = _reference(seq_len, d_model)
    assert out.shape == (seq_len, d_model)
    assert jnp.allclose(out, ref, atol=1e-5, rtol=1e-5)

    # Secondary check: d_model not dividing 128 (fold k=8) + multi-tile grid
    # with a partial last block, via a deliberately tiny tile budget.
    seq_len2, d_model2, max_len2 = 200, 48, 256
    x2 = jax.random.normal(k2, (2, seq_len2), dtype=jnp.float32)
    out2 = jax.block_until_ready(
        absolute_positional_encoding(x2, d_model=d_model2, max_len=max_len2,
                                     tile_budget_bytes=8 * 1024))
    ref2 = _reference(seq_len2, d_model2)
    assert out2.shape == (seq_len2, d_model2)
    assert jnp.allclose(out2, ref2, atol=1e-4, rtol=1e-4)

    print("KERNEL_OK")
</pallas_src>

<mosaic_0001>
module attributes {stable_mosaic.version = 11 : i64} {
  func.func @_abs_pos_enc_kernel(%arg0: i32, %arg1: memref<2x128xf32, #tpu.memory_space<vmem>>, %arg2: memref<2x128xf32, #tpu.memory_space<vmem>>, %arg3: memref<1x1x128xf32, #tpu.memory_space<vmem>>, %arg4: memref<1x1x128xf32, #tpu.memory_space<vmem>>, %arg5: memref<2x128xf32, #tpu.memory_space<vmem>>) attributes {dimension_semantics = [#tpu.dimension_semantics<parallel>], iteration_bounds = array<i64: 1>, scalar_prefetch = 0 : i64, scratch_operands = 0 : i64, tpu.core_type = #tpu.core_type<tc>, window_params = [{pipeline_mode = #tpu.pipeline_mode<synchronous>, transform_indices = @transform_0, window_bounds = array<i64: 2, 128>}, {pipeline_mode = #tpu.pipeline_mode<synchronous>, transform_indices = @transform_1, window_bounds = array<i64: 2, 128>}, {transform_indices = @transform_2, window_bounds = array<i64: 1, 1, 128>}, {transform_indices = @transform_3, window_bounds = array<i64: 1, 1, 128>}, {transform_indices = @transform_4, window_bounds = array<i64: 2, 128>}]} {
    %c0 = arith.constant 0 : index
    %c0_0 = arith.constant 0 : index
    %0 = vector.load %arg1[%c0, %c0_0] : memref<2x128xf32, #tpu.memory_space<vmem>>, vector<2x128xf32>
    %c0_1 = arith.constant 0 : index
    %c0_2 = arith.constant 0 : index
    %c0_3 = arith.constant 0 : index
    %1 = vector.load %arg3[%c0_1, %c0_2, %c0_3] : memref<1x1x128xf32, #tpu.memory_space<vmem>>, vector<1x1x128xf32>
    %2 = vector.shape_cast %1 : vector<1x1x128xf32> to vector<1x128xf32>
    %3 = vector.broadcast %2 : vector<1x128xf32> to vector<2x128xf32>
    %4 = arith.mulf %0, %3 : vector<2x128xf32>
    %c0_4 = arith.constant 0 : index
    %c0_5 = arith.constant 0 : index
    %5 = vector.load %arg2[%c0_4, %c0_5] : memref<2x128xf32, #tpu.memory_space<vmem>>, vector<2x128xf32>
    %c0_6 = arith.constant 0 : index
    %c0_7 = arith.constant 0 : index
    %c0_8 = arith.constant 0 : index
    %6 = vector.load %arg4[%c0_6, %c0_7, %c0_8] : memref<1x1x128xf32, #tpu.memory_space<vmem>>, vector<1x1x128xf32>
    %7 = vector.shape_cast %6 : vector<1x1x128xf32> to vector<1x128xf32>
    %8 = vector.broadcast %7 : vector<1x128xf32> to vector<2x128xf32>
    %9 = arith.mulf %5, %8 : vector<2x128xf32>
    %10 = arith.addf %4, %9 : vector<2x128xf32>
    %c0_9 = arith.constant 0 : index
    %c0_10 = arith.constant 0 : index
    %11 = vector.load %arg5[%c0_9, %c0_10] : memref<2x128xf32, #tpu.memory_space<vmem>>, vector<2x128xf32>
    tpu.vector_store %arg5[%c0_9, %c0_10], %10 {strides = array<i32>} : memref<2x128xf32, #tpu.memory_space<vmem>>, vector<2x128xf32>,
    return
  }
  func.func @transform_0(%arg0: i32) -> (i32, i32) {
    %c0_i32 = arith.constant 0 : i32
    %c0_i32_0 = arith.constant 0 : i32
    %c0_i32_1 = arith.constant 0 : i32
    return %c0_i32, %c0_i32_0 : i32, i32
  }
  func.func @transform_1(%arg0: i32) -> (i32, i32) {
    %c0_i32 = arith.constant 0 : i32
    %c0_i32_0 = arith.constant 0 : i32
    %c0_i32_1 = arith.constant 0 : i32
    return %c0_i32, %c0_i32_0 : i32, i32
  }
  func.func @transform_2(%arg0: i32) -> (i32, i32, i32) {
    %c0_i32 = arith.constant 0 : i32
    %c0_i32_0 = arith.constant 0 : i32
    %c0_i32_1 = arith.constant 0 : i32
    return %arg0, %c0_i32, %c0_i32_0 : i32, i32, i32
  }
  func.func @transform_3(%arg0: i32) -> (i32, i32, i32) {
    %c0_i32 = arith.constant 0 : i32
    %c0_i32_0 = arith.constant 0 : i32
    %c0_i32_1 = arith.constant 0 : i32
    return %arg0, %c0_i32, %c0_i32_0 : i32, i32, i32
  }
  func.func @transform_4(%arg0: i32) -> (i32, i32) {
    %c0_i32 = arith.constant 0 : i32
    %c0_i32_0 = arith.constant 0 : i32
    return %arg0, %c0_i32 : i32, i32
  }
}

</mosaic_0001>

<llo_original>
// kernel: tpu_custom_call.1
$region0: #{tpu_custom_call.1}
  #allocation0 [shape = 'u32[]', space=smem, size = 0x4, offset = 0x4, fixed_abs, tag = 'smem constant byte address 0x4 - core index']
  #allocation1 [shape = 'u32[144,128]{1,0:T(1,128)}', space=vmem, size = 0x12000, scoped, tag = 'internal scratch']
  %s0 = inlined_call_operand.hbm [shape: f32[2,128], index: 0, kind: input, shape index: {}]
  %s1 = inlined_call_operand.vmem [shape: f32[2,128], index: 1, kind: input, shape index: {}]
  %s2 = inlined_call_operand.vmem [shape: f32[1,1,128], index: 2, kind: input, shape index: {}]
  %s3 = inlined_call_operand.vmem [shape: f32[1,1,128], index: 3, kind: input, shape index: {}]
  %s4 = inlined_call_operand.hbm [shape: f32[2,128], index: 4, kind: output, shape index: {}]
  %s5 = sld [smem:[#allocation0]]
  $region30: #{tpu_custom_call.1} parent=0
    _
  %s7 = ssub.s32 1, %s5
  %s8 = scalar_select 0, %s7, %s5
  $region1: #{tpu_custom_call.1} parent=0
    #allocation2 [shape = 'u8[1024]{0}', space=vmem, size = 0x400, scoped, tag = 'input window, operand 0, single buffered']
    #allocation3 [shape = 's32[1]{0}', space=sflag, size = 0x4, scoped, tag = 'scoped memory for tpu_custom_call.1']
    #allocation4 [shape = 's32[1]{0}', space=sflag, size = 0x4, scoped, tag = 'scoped memory for tpu_custom_call.1']
    #allocation5 [shape = 'u8[1024]{0}', space=vmem, size = 0x400, scoped, tag = 'output window, operand 0, single buffered']
    %9 = vsyncpa [#allocation3], 0
    %10 = vsyncpa [#allocation4], 0
    // Predicated region
    $region2: #{tpu_custom_call.1} parent=1 // pred_check
      _
    $region3: #{tpu_custom_call.1} parent=1 // pred_check_branch
      %12 = sbr.rel (0) target = $region5
    $region4: #{tpu_custom_call.1} parent=1 // pred_region
      %s14 = ssub.s32 32, 32
      %15 = vsyncadd [#allocation3], %s14
      %s17 = sshll.u32 [#allocation2], 4
      %s18 = int_to_ptr.vmem [resolvable:$true] %s17
      %20 = dma.hbm_to_vmem [thread:$0]  %s0, 32, %s18, [#allocation3]
    $region5: #{tpu_custom_call.1} parent=1 // pred_fallthru
      _
    // Predicated region
    $region6: #{tpu_custom_call.1} parent=1 // pred_check
      _
    $region7: #{tpu_custom_call.1} parent=1 // pred_check_branch
      %22 = sbr.rel (0) target = $region9
    $region8: #{tpu_custom_call.1} parent=1 // pred_region
      _
    $region9: #{tpu_custom_call.1} parent=1 // pred_fallthru
      _
    // Predicated region
    $region10: #{tpu_custom_call.1} parent=1 // pred_check
      _
    $region11: #{tpu_custom_call.1} parent=1 // pred_check_branch
      %24 = sbr.rel (0) target = $region13
    $region12: #{tpu_custom_call.1} parent=1 // pred_region
      _
    $region13: #{tpu_custom_call.1} parent=1 // pred_fallthru
      _
    // Predicated region
    $region14: #{tpu_custom_call.1} parent=1 // pred_check
      _
    $region15: #{tpu_custom_call.1} parent=1 // pred_check_branch
      %26 = sbr.rel (0) target = $region17
    $region16: #{tpu_custom_call.1} parent=1 // pred_region
      _
    $region17: #{tpu_custom_call.1} parent=1 // pred_fallthru
      _
    // Predicated region
    $region18: #{tpu_custom_call.1} parent=1 // pred_check
      _
    $region19: #{tpu_custom_call.1} parent=1 // pred_check_branch
      %28 = sbr.rel (0) target = $region21
    $region20: #{tpu_custom_call.1} parent=1 // pred_region
      %29 = dma.done [#allocation3], 32
    $region21: #{tpu_custom_call.1} parent=1 // pred_fallthru
      _
    %v30 = vld [vmem:[#allocation2] sm:$0x3]
    %v31 = vld [vmem:[%s2] sm:$0x1]
    %v33 = vlaneseq
    %v34 = vshrl.u32 %v33, 7
    %v35 = vsub.s32 0, %v34
    %v36 = vrot.slane %v31, %v35
    %v38 = vmul.f32 %v30, %v36
    %v39 = vld [vmem:[%s1] sm:$0x3]
    %v40 = vld [vmem:[%s3] sm:$0x1]
    %v42 = vlaneseq
    %v43 = vshrl.u32 %v42, 7
    %v44 = vsub.s32 0, %v43
    %v45 = vrot.slane %v40, %v44
    %v47 = vmul.f32 %v39, %v45
    %v48 = vadd.f32 %v38, %v47
    %49 = vst [vmem:[#allocation5] sm:$0x3] %v48
    // Predicated region
    $region22: #{tpu_custom_call.1} parent=1 // pred_check
      _
    $region23: #{tpu_custom_call.1} parent=1 // pred_check_branch
      %51 = sbr.rel (0) target = $region25
    $region24: #{tpu_custom_call.1} parent=1 // pred_region
      %s53 = ssub.s32 32, 32
      %54 = vsyncadd [#allocation4], %s53
      %s56 = sshll.u32 [#allocation5], 4
      %s57 = int_to_ptr.vmem [resolvable:$true] %s56
      %59 = dma.vmem_to_hbm [thread:$0]  %s57, 32, %s4, [#allocation4]
    $region25: #{tpu_custom_call.1} parent=1 // pred_fallthru
      _
    // Predicated region
    $region26: #{tpu_custom_call.1} parent=1 // pred_check
      _
    $region27: #{tpu_custom_call.1} parent=1 // pred_check_branch
      %61 = sbr.rel (0) target = $region29
    $region28: #{tpu_custom_call.1} parent=1 // pred_region
      %62 = dma.done [#allocation4], 32
    $region29: #{tpu_custom_call.1} parent=1 // pred_fallthru
      _
    %63 = vsyncpa [#allocation3], 1
    %64 = vsyncpa [#allocation4], 1

</llo_original>
